<compile_context>
chip_gen: v5e
topology: v5e:2x2
jax: 0.10.0
libtpu: 0.0.40
codegen_flags: <defaults>
</compile_context>

<pallas_src>
import functools

import jax
import jax.numpy as jnp
from jax import lax
from jax.experimental import pallas as pl
from jax.experimental.pallas import tpu as pltpu

LANE = 128
SUBLANE = 8


def _round_up(x, m):
    return (x + m - 1) // m * m


# ---------------------------------------------------------------------------
# Kernels
# ---------------------------------------------------------------------------

def _mlp(x, w1, b1, w2, b2):
    h = jnp.dot(x, w1, preferred_element_type=jnp.float32) + b1
    h = jnp.maximum(h, 0.0)
    return jnp.dot(h, w2, preferred_element_type=jnp.float32) + b2


def _logits_kernel(x_ref, w1_ref, b1_ref, w2_ref, b2_ref, logits_ref):
    logits_ref[...] = _mlp(
        x_ref[...], w1_ref[...], b1_ref[...], w2_ref[...], b2_ref[...]
    ).astype(logits_ref.dtype)


def _fused_logits_ce_kernel(x_ref, y_ref, w1_ref, b1_ref, w2_ref, b2_ref,
                            cw_ref, logits_ref, part_ref, *, n_classes):
    """logits = MLP(x); weighted-CE partial sums for this batch tile.

    y_ref holds int32 labels, -1 on padded rows (contributes zero weight).
    cw_ref holds class weights zero-padded to the lane-dense class width.
    part_ref is one (8,128) tile: [0,0]=sum_i w[y_i]*nll_i, [0,1]=sum_i w[y_i].
    """
    logits = _mlp(x_ref[...], w1_ref[...], b1_ref[...], w2_ref[...], b2_ref[...])
    logits_ref[...] = logits.astype(logits_ref.dtype)

    bt, cp = logits.shape
    col = lax.broadcasted_iota(jnp.int32, (bt, cp), 1)

    # Mask padded class columns out of the softmax.
    masked = jnp.where(col < n_classes, logits, jnp.float32(-1e30))
    m = jnp.max(masked, axis=-1, keepdims=True)
    lse = m + jnp.log(jnp.sum(jnp.exp(masked - m), axis=-1, keepdims=True))
    logp = masked - lse                                   # (bt, cp)

    sel = col == y_ref[...]                               # (bt, cp); y=-1 -> all False
    w_row = cw_ref[...]                                   # (1, cp)
    per_w = jnp.sum(jnp.where(sel, w_row, 0.0), axis=-1, keepdims=True)   # (bt, 1)
    nll = -jnp.sum(jnp.where(sel, logp, 0.0), axis=-1, keepdims=True)     # (bt, 1)

    numer = jnp.sum(per_w * nll)
    denom = jnp.sum(per_w)

    sub = lax.broadcasted_iota(jnp.int32, (SUBLANE, LANE), 0)
    lane = lax.broadcasted_iota(jnp.int32, (SUBLANE, LANE), 1)
    part_ref[...] = jnp.where(
        (sub == 0) & (lane == 0), numer,
        jnp.where((sub == 0) & (lane == 1), denom, 0.0))


# ---------------------------------------------------------------------------
# Wrappers (glue stays in plain JAX)
# ---------------------------------------------------------------------------

def _build_features(x_continuous, x_categorical, params):
    """Embed categoricals, concat with continuous, zero-pad to D_pad."""
    embs = [jnp.take(params["emb"][i], x_categorical[:, i], axis=0)
            for i in range(x_categorical.shape[1])]
    x = jnp.concatenate(
        [x_continuous.astype(jnp.float32)] + [e.astype(jnp.float32) for e in embs],
        axis=-1)
    b, d = x.shape
    d_pad = params["w1"].shape[0]
    if d < d_pad:
        x = jnp.concatenate([x, jnp.zeros((b, d_pad - d), jnp.float32)], axis=-1)
    return x


def forward(batch, params, class_weights=None, return_loss=False,
            return_all=False, block_b=256):
    """Mirrors Model.forward (use_binary=False default)."""
    x = _build_features(batch["x_continuous"], batch["x_categorical"], params)
    b = x.shape[0]
    d_pad, h_pad = params["w1"].shape
    c_pad = params["w2"].shape[1]
    n_classes = params["n_classes"]

    b_tile = min(_round_up(b, SUBLANE), _round_up(block_b, SUBLANE))
    b_pad = _round_up(b, b_tile)
    n_tiles = b_pad // b_tile
    if b_pad > b:
        x = jnp.concatenate([x, jnp.zeros((b_pad - b, d_pad), jnp.float32)], axis=0)

    need_loss = return_loss or return_all
    cparams = pltpu.CompilerParams(dimension_semantics=("parallel",))

    w_specs = [
        pl.BlockSpec((d_pad, h_pad), lambda i: (0, 0)),   # w1
        pl.BlockSpec((1, h_pad), lambda i: (0, 0)),       # b1
        pl.BlockSpec((h_pad, c_pad), lambda i: (0, 0)),   # w2
        pl.BlockSpec((1, c_pad), lambda i: (0, 0)),       # b2
    ]
    x_spec = pl.BlockSpec((b_tile, d_pad), lambda i: (i, 0))
    logits_spec = pl.BlockSpec((b_tile, c_pad), lambda i: (i, 0))

    if not need_loss:
        logits_pad = pl.pallas_call(
            _logits_kernel,
            out_shape=jax.ShapeDtypeStruct((b_pad, c_pad), jnp.float32),
            grid=(n_tiles,),
            in_specs=[x_spec] + w_specs,
            out_specs=logits_spec,
            compiler_params=cparams,
        )(x, params["w1"], params["b1"], params["w2"], params["b2"])
        return logits_pad[:b, :n_classes]

    if class_weights is None:
        class_weights = jnp.ones((n_classes,), jnp.float32)
    cw = jnp.zeros((1, c_pad), jnp.float32).at[0, :n_classes].set(
        class_weights.astype(jnp.float32))

    y = batch["y"].astype(jnp.int32).reshape(-1, 1)
    if b_pad > b:
        y = jnp.concatenate([y, jnp.full((b_pad - b, 1), -1, jnp.int32)], axis=0)

    kernel = functools.partial(_fused_logits_ce_kernel, n_classes=n_classes)
    logits_pad, partials = pl.pallas_call(
        kernel,
        out_shape=(
            jax.ShapeDtypeStruct((b_pad, c_pad), jnp.float32),
            jax.ShapeDtypeStruct((n_tiles * SUBLANE, LANE), jnp.float32),
        ),
        grid=(n_tiles,),
        in_specs=[x_spec,
                  pl.BlockSpec((b_tile, 1), lambda i: (i, 0))] + w_specs +
                 [pl.BlockSpec((1, c_pad), lambda i: (0, 0))],
        out_specs=(
            logits_spec,
            pl.BlockSpec((SUBLANE, LANE), lambda i: (i, 0)),
        ),
        compiler_params=cparams,
    )(x, y, params["w1"], params["b1"], params["w2"], params["b2"], cw)

    part = partials.reshape(n_tiles, SUBLANE, LANE)
    loss = jnp.sum(part[:, 0, 0]) / jnp.sum(part[:, 0, 1])
    logits = logits_pad[:b, :n_classes]

    if return_all:
        return logits, loss
    return loss


# ---------------------------------------------------------------------------
# Parameter construction + reference + demo
# ---------------------------------------------------------------------------

def make_params(key, n_cont, cat_cards, emb_dim, hidden, n_classes):
    keys = jax.random.split(key, 4 + len(cat_cards))
    d = n_cont + emb_dim * len(cat_cards)
    d_pad = _round_up(d, LANE)
    h_pad = _round_up(hidden, LANE)
    c_pad = _round_up(n_classes, LANE)

    w1 = 0.1 * jax.random.normal(keys[-4], (d, hidden), jnp.float32)
    b1 = 0.05 * jax.random.normal(keys[-3], (1, hidden), jnp.float32)
    w2 = 0.1 * jax.random.normal(keys[-2], (hidden, n_classes), jnp.float32)
    b2 = 0.05 * jax.random.normal(keys[-1], (1, n_classes), jnp.float32)

    return {
        "emb": [0.1 * jax.random.normal(keys[i], (card, emb_dim), jnp.float32)
                for i, card in enumerate(cat_cards)],
        # Zero-padded (once, at build time) to MXU/lane-aligned shapes.
        "w1": jnp.zeros((d_pad, h_pad), jnp.float32).at[:d, :hidden].set(w1),
        "b1": jnp.zeros((1, h_pad), jnp.float32).at[:, :hidden].set(b1),
        "w2": jnp.zeros((h_pad, c_pad), jnp.float32).at[:hidden, :n_classes].set(w2),
        "b2": jnp.zeros((1, c_pad), jnp.float32).at[:, :n_classes].set(b2),
        # Raw (unpadded) copies for the pure-JAX reference.
        "w1_raw": w1, "b1_raw": b1, "w2_raw": w2, "b2_raw": b2,
        "n_features": d, "n_classes": n_classes,
    }


def reference_forward(batch, params, class_weights):
    """Pure-JAX reference for numerical sanity checking."""
    embs = [jnp.take(params["emb"][i], batch["x_categorical"][:, i], axis=0)
            for i in range(batch["x_categorical"].shape[1])]
    x = jnp.concatenate([batch["x_continuous"]] + embs, axis=-1)
    h = jnp.maximum(x @ params["w1_raw"] + params["b1_raw"], 0.0)
    logits = h @ params["w2_raw"] + params["b2_raw"]
    logp = jax.nn.log_softmax(logits, axis=-1)
    nll = -jnp.take_along_axis(logp, batch["y"][:, None], axis=-1)[:, 0]
    w = class_weights[batch["y"]]
    loss = jnp.sum(w * nll) / jnp.sum(w)
    return logits, loss


if __name__ == "__main__":
    key = jax.random.PRNGKey(0)
    k_par, k_cont, k_cat, k_y = jax.random.split(key, 4)

    B = 8                 # batch
    n_cont = 8            # continuous features
    cat_cards = (5, 7)    # two categorical features
    emb_dim = 4
    hidden = 32
    n_classes = 4

    params = make_params(k_par, n_cont, cat_cards, emb_dim, hidden, n_classes)
    class_weights = jnp.array([1.0, 2.0, 0.5, 1.5], jnp.float32)

    batch = {
        "x_continuous": jax.random.normal(k_cont, (B, n_cont), jnp.float32),
        "x_categorical": jnp.stack(
            [jax.random.randint(jax.random.fold_in(k_cat, i), (B,), 0, c)
             for i, c in enumerate(cat_cards)], axis=1).astype(jnp.int32),
        "y": jax.random.randint(k_y, (B,), 0, n_classes).astype(jnp.int32),
    }

    # Fused logits + weighted-CE path (return_all=True).
    logits, loss = forward(batch, params, class_weights, return_all=True)
    logits = jax.block_until_ready(logits)
    loss = jax.block_until_ready(loss)

    # Logits-only path (default forward()).
    logits_only = jax.block_until_ready(forward(batch, params, class_weights))

    ref_logits, ref_loss = reference_forward(batch, params, class_weights)
    assert logits.shape == (B, n_classes)
    assert jnp.allclose(logits, ref_logits, atol=2e-4, rtol=2e-4)
    assert jnp.allclose(logits_only, ref_logits, atol=2e-4, rtol=2e-4)
    assert jnp.allclose(loss, ref_loss, atol=2e-4, rtol=2e-4)

    print("KERNEL_OK")
</pallas_src>

<mosaic_0001>
module attributes {stable_mosaic.version = 11 : i64} {
  func.func @_fused_logits_ce_kernel(%arg0: i32, %arg1: memref<8x128xf32, #tpu.memory_space<vmem>>, %arg2: memref<8x1xi32, #tpu.memory_space<vmem>>, %arg3: memref<128x128xf32, #tpu.memory_space<vmem>>, %arg4: memref<1x128xf32, #tpu.memory_space<vmem>>, %arg5: memref<128x128xf32, #tpu.memory_space<vmem>>, %arg6: memref<1x128xf32, #tpu.memory_space<vmem>>, %arg7: memref<1x128xf32, #tpu.memory_space<vmem>>, %arg8: memref<8x128xf32, #tpu.memory_space<vmem>>, %arg9: memref<8x128xf32, #tpu.memory_space<vmem>>) attributes {dimension_semantics = [#tpu.dimension_semantics<parallel>], iteration_bounds = array<i64: 1>, scalar_prefetch = 0 : i64, scratch_operands = 0 : i64, tpu.core_type = #tpu.core_type<tc>, window_params = [{transform_indices = @transform_0, window_bounds = array<i64: 8, 128>}, {transform_indices = @transform_1, window_bounds = array<i64: 8, 1>}, {pipeline_mode = #tpu.pipeline_mode<synchronous>, transform_indices = @transform_2, window_bounds = array<i64: 128, 128>}, {pipeline_mode = #tpu.pipeline_mode<synchronous>, transform_indices = @transform_3, window_bounds = array<i64: 1, 128>}, {pipeline_mode = #tpu.pipeline_mode<synchronous>, transform_indices = @transform_4, window_bounds = array<i64: 128, 128>}, {pipeline_mode = #tpu.pipeline_mode<synchronous>, transform_indices = @transform_5, window_bounds = array<i64: 1, 128>}, {pipeline_mode = #tpu.pipeline_mode<synchronous>, transform_indices = @transform_6, window_bounds = array<i64: 1, 128>}, {transform_indices = @transform_7, window_bounds = array<i64: 8, 128>}, {transform_indices = @transform_8, window_bounds = array<i64: 8, 128>}]} {
    %c0 = arith.constant 0 : index
    %c0_0 = arith.constant 0 : index
    %0 = vector.load %arg1[%c0, %c0_0] : memref<8x128xf32, #tpu.memory_space<vmem>>, vector<8x128xf32>
    %c0_1 = arith.constant 0 : index
    %c0_2 = arith.constant 0 : index
    %1 = vector.load %arg3[%c0_1, %c0_2] : memref<128x128xf32, #tpu.memory_space<vmem>>, vector<128x128xf32>
    %c0_3 = arith.constant 0 : index
    %c0_4 = arith.constant 0 : index
    %2 = vector.load %arg4[%c0_3, %c0_4] : memref<1x128xf32, #tpu.memory_space<vmem>>, vector<1x128xf32>
    %c0_5 = arith.constant 0 : index
    %c0_6 = arith.constant 0 : index
    %3 = vector.load %arg5[%c0_5, %c0_6] : memref<128x128xf32, #tpu.memory_space<vmem>>, vector<128x128xf32>
    %c0_7 = arith.constant 0 : index
    %c0_8 = arith.constant 0 : index
    %4 = vector.load %arg6[%c0_7, %c0_8] : memref<1x128xf32, #tpu.memory_space<vmem>>, vector<1x128xf32>
    %cst = arith.constant dense<0.000000e+00> : vector<8x128xf32>
    %5 = tpu.matmul %0, %1, %cst {dimension_numbers = #tpu.dot_dimension_numbers<[1], [0], [0], [1], [0, 0, 1, 1], [], []>} : vector<8x128xf32>, vector<128x128xf32>, vector<8x128xf32> -> vector<8x128xf32>
    %6 = vector.broadcast %2 : vector<1x128xf32> to vector<8x128xf32>
    %7 = arith.addf %5, %6 : vector<8x128xf32>
    %cst_9 = arith.constant 0.000000e+00 : f32
    %8 = vector.broadcast %cst_9 : f32 to vector<8x128xf32>
    %9 = arith.maximumf %7, %8 : vector<8x128xf32>
    %cst_10 = arith.constant dense<0.000000e+00> : vector<8x128xf32>
    %10 = tpu.matmul %9, %3, %cst_10 {dimension_numbers = #tpu.dot_dimension_numbers<[1], [0], [0], [1], [0, 0, 1, 1], [], []>} : vector<8x128xf32>, vector<128x128xf32>, vector<8x128xf32> -> vector<8x128xf32>
    %11 = vector.broadcast %4 : vector<1x128xf32> to vector<8x128xf32>
    %12 = arith.addf %10, %11 : vector<8x128xf32>
    %c0_11 = arith.constant 0 : index
    %c0_12 = arith.constant 0 : index
    %13 = vector.load %arg8[%c0_11, %c0_12] : memref<8x128xf32, #tpu.memory_space<vmem>>, vector<8x128xf32>
    tpu.vector_store %arg8[%c0_11, %c0_12], %12 {strides = array<i32>} : memref<8x128xf32, #tpu.memory_space<vmem>>, vector<8x128xf32>,
    %14 = tpu.iota {dimensions = array<i32: 1>} : vector<8x128xi32>
    %c4_i32 = arith.constant 4 : i32
    %15 = vector.broadcast %c4_i32 : i32 to vector<8x128xi32>
    %16 = arith.cmpi slt, %14, %15 : vector<8x128xi32>
    %cst_13 = arith.constant -1.000000e+30 : f32
    %17 = vector.broadcast %cst_13 : f32 to vector<8x128xf32>
    %18 = arith.select %16, %12, %17 : vector<8x128xi1>, vector<8x128xf32>
    %cst_14 = arith.constant dense<0xFF800000> : vector<8xf32>
    %19 = vector.multi_reduction <maximumf>, %18, %cst_14 [1] : vector<8x128xf32> to vector<8xf32>
    %20 = vector.shape_cast %19 : vector<8xf32> to vector<8x1xf32>
    %21 = vector.broadcast %20 : vector<8x1xf32> to vector<8x128xf32>
    %22 = arith.subf %18, %21 : vector<8x128xf32>
    %23 = math.exp %22 : vector<8x128xf32>
    %cst_15 = arith.constant dense<0.000000e+00> : vector<8xf32>
    %24 = vector.multi_reduction <add>, %23, %cst_15 [1] : vector<8x128xf32> to vector<8xf32>
    %25 = vector.shape_cast %24 : vector<8xf32> to vector<8x1xf32>
    %26 = math.log %25 : vector<8x1xf32>
    %27 = arith.addf %20, %26 : vector<8x1xf32>
    %28 = vector.broadcast %27 : vector<8x1xf32> to vector<8x128xf32>
    %29 = arith.subf %18, %28 : vector<8x128xf32>
    %c0_16 = arith.constant 0 : index
    %c0_17 = arith.constant 0 : index
    %30 = vector.load %arg2[%c0_16, %c0_17] : memref<8x1xi32, #tpu.memory_space<vmem>>, vector<8x1xi32>
    %31 = vector.broadcast %30 : vector<8x1xi32> to vector<8x128xi32>
    %32 = arith.cmpi eq, %14, %31 : vector<8x128xi32>
    %c0_18 = arith.constant 0 : index
    %c0_19 = arith.constant 0 : index
    %33 = vector.load %arg7[%c0_18, %c0_19] : memref<1x128xf32, #tpu.memory_space<vmem>>, vector<1x128xf32>
    %cst_20 = arith.constant 0.000000e+00 : f32
    %34 = vector.shape_cast %33 : vector<1x128xf32> to vector<1x128xf32>
    %35 = vector.broadcast %34 : vector<1x128xf32> to vector<8x128xf32>
    %36 = vector.broadcast %cst_20 : f32 to vector<8x128xf32>
    %37 = arith.select %32, %35, %36 : vector<8x128xi1>, vector<8x128xf32>
    %cst_21 = arith.constant dense<0.000000e+00> : vector<8xf32>
    %38 = vector.multi_reduction <add>, %37, %cst_21 [1] : vector<8x128xf32> to vector<8xf32>
    %39 = vector.shape_cast %38 : vector<8xf32> to vector<8x1xf32>
    %cst_22 = arith.constant 0.000000e+00 : f32
    %40 = vector.broadcast %cst_22 : f32 to vector<8x128xf32>
    %41 = arith.select %32, %29, %40 : vector<8x128xi1>, vector<8x128xf32>
    %cst_23 = arith.constant dense<0.000000e+00> : vector<8xf32>
    %42 = vector.multi_reduction <add>, %41, %cst_23 [1] : vector<8x128xf32> to vector<8xf32>
    %43 = vector.shape_cast %42 : vector<8xf32> to vector<8x1xf32>
    %cst_24 = arith.constant 0.000000e+00 : f32
    %44 = vector.broadcast %cst_24 : f32 to vector<8x1xf32>
    %45 = arith.subf %44, %43 : vector<8x1xf32>
    %46 = arith.mulf %39, %45 : vector<8x1xf32>
    %47 = vector.shape_cast %46 : vector<8x1xf32> to vector<1x8x1xf32>
    %cst_25 = arith.constant dense<0.000000e+00> : vector<1xf32>
    %48 = vector.multi_reduction <add>, %47, %cst_25 [1, 2] : vector<1x8x1xf32> to vector<1xf32>
    %49 = vector.shape_cast %48 : vector<1xf32> to vector<1x1x1xf32>
    %50 = vector.extract %49[0, 0, 0] : f32 from vector<1x1x1xf32>
    %51 = vector.shape_cast %39 : vector<8x1xf32> to vector<1x8x1xf32>
    %cst_26 = arith.constant dense<0.000000e+00> : vector<1xf32>
    %52 = vector.multi_reduction <add>, %51, %cst_26 [1, 2] : vector<1x8x1xf32> to vector<1xf32>
    %53 = vector.shape_cast %52 : vector<1xf32> to vector<1x1x1xf32>
    %54 = vector.extract %53[0, 0, 0] : f32 from vector<1x1x1xf32>
    %55 = tpu.iota {dimensions = array<i32: 0>} : vector<8x128xi32>
    %56 = tpu.iota {dimensions = array<i32: 1>} : vector<8x128xi32>
    %c0_i32 = arith.constant 0 : i32
    %57 = vector.broadcast %c0_i32 : i32 to vector<8x128xi32>
    %58 = arith.cmpi eq, %55, %57 : vector<8x128xi32>
    %c0_i32_27 = arith.constant 0 : i32
    %59 = vector.broadcast %c0_i32_27 : i32 to vector<8x128xi32>
    %60 = arith.cmpi eq, %56, %59 : vector<8x128xi32>
    %61 = arith.andi %58, %60 : vector<8x128xi1>
    %c0_i32_28 = arith.constant 0 : i32
    %62 = vector.broadcast %c0_i32_28 : i32 to vector<8x128xi32>
    %63 = arith.cmpi eq, %55, %62 : vector<8x128xi32>
    %c1_i32 = arith.constant 1 : i32
    %64 = vector.broadcast %c1_i32 : i32 to vector<8x128xi32>
    %65 = arith.cmpi eq, %56, %64 : vector<8x128xi32>
    %66 = arith.andi %63, %65 : vector<8x128xi1>
    %cst_29 = arith.constant 0.000000e+00 : f32
    %67 = vector.broadcast %54 : f32 to vector<8x128xf32>
    %68 = vector.broadcast %cst_29 : f32 to vector<8x128xf32>
    %69 = arith.select %66, %67, %68 : vector<8x128xi1>, vector<8x128xf32>
    %70 = vector.broadcast %50 : f32 to vector<8x128xf32>
    %71 = arith.select %61, %70, %69 : vector<8x128xi1>, vector<8x128xf32>
    %c0_30 = arith.constant 0 : index
    %c0_31 = arith.constant 0 : index
    %72 = vector.load %arg9[%c0_30, %c0_31] : memref<8x128xf32, #tpu.memory_space<vmem>>, vector<8x128xf32>
    tpu.vector_store %arg9[%c0_30, %c0_31], %71 {strides = array<i32>} : memref<8x128xf32, #tpu.memory_space<vmem>>, vector<8x128xf32>,
    return
  }
  func.func @transform_0(%arg0: i32) -> (i32, i32) {
    %c0_i32 = arith.constant 0 : i32
    %c0_i32_0 = arith.constant 0 : i32
    return %arg0, %c0_i32 : i32, i32
  }
  func.func @transform_1(%arg0: i32) -> (i32, i32) {
    %c0_i32 = arith.constant 0 : i32
    %c0_i32_0 = arith.constant 0 : i32
    return %arg0, %c0_i32 : i32, i32
  }
  func.func @transform_2(%arg0: i32) -> (i32, i32) {
    %c0_i32 = arith.constant 0 : i32
    %c0_i32_0 = arith.constant 0 : i32
    %c0_i32_1 = arith.constant 0 : i32
    return %c0_i32, %c0_i32_0 : i32, i32
  }
  func.func @transform_3(%arg0: i32) -> (i32, i32) {
    %c0_i32 = arith.constant 0 : i32
    %c0_i32_0 = arith.constant 0 : i32
    %c0_i32_1 = arith.constant 0 : i32
    return %c0_i32, %c0_i32_0 : i32, i32
  }
  func.func @transform_4(%arg0: i32) -> (i32, i32) {
    %c0_i32 = arith.constant 0 : i32
    %c0_i32_0 = arith.constant 0 : i32
    %c0_i32_1 = arith.constant 0 : i32
    return %c0_i32, %c0_i32_0 : i32, i32
  }
  func.func @transform_5(%arg0: i32) -> (i32, i32) {
    %c0_i32 = arith.constant 0 : i32
    %c0_i32_0 = arith.constant 0 : i32
    %c0_i32_1 = arith.constant 0 : i32
    return %c0_i32, %c0_i32_0 : i32, i32
  }
  func.func @transform_6(%arg0: i32) -> (i32, i32) {
    %c0_i32 = arith.constant 0 : i32
    %c0_i32_0 = arith.constant 0 : i32
    %c0_i32_1 = arith.constant 0 : i32
    return %c0_i32, %c0_i32_0 : i32, i32
  }
  func.func @transform_7(%arg0: i32) -> (i32, i32) {
    %c0_i32 = arith.constant 0 : i32
    %c0_i32_0 = arith.constant 0 : i32
    return %arg0, %c0_i32 : i32, i32
  }
  func.func @transform_8(%arg0: i32) -> (i32, i32) {
    %c0_i32 = arith.constant 0 : i32
    %c0_i32_0 = arith.constant 0 : i32
    return %arg0, %c0_i32 : i32, i32
  }
}

</mosaic_0001>

<llo_original>
// kernel: tpu_custom_call.1
$region0: #{tpu_custom_call.1}
  #allocation0 [shape = 'u32[]', space=smem, size = 0x4, offset = 0x4, fixed_abs, tag = 'smem constant byte address 0x4 - core index']
  #allocation1 [shape = 'u32[72,128]{1,0:T(1,128)}', space=vmem, size = 0x9000, scoped, tag = 'internal scratch']
  %s0 = inlined_call_operand.vmem [shape: f32[8,128], index: 0, kind: input, shape index: {}]
  %s1 = inlined_call_operand.vmem [shape: s32[8,1], index: 1, kind: input, shape index: {}]
  %s2 = inlined_call_operand.hbm [shape: f32[128,128], index: 2, kind: input, shape index: {}]
  %s3 = inlined_call_operand.vmem [shape: f32[1,128], index: 3, kind: input, shape index: {}]
  %s4 = inlined_call_operand.hbm [shape: f32[128,128], index: 4, kind: input, shape index: {}]
  %s5 = inlined_call_operand.vmem [shape: f32[1,128], index: 5, kind: input, shape index: {}]
  %s6 = inlined_call_operand.vmem [shape: f32[1,128], index: 6, kind: input, shape index: {}]
  %s7 = inlined_call_operand.hbm [shape: f32[8,128], index: 7, kind: output, shape index: {0}]
  %s8 = inlined_call_operand.hbm [shape: f32[8,128], index: 8, kind: output, shape index: {1}]
  %9 = xla_tuple %s7, %s8
  %s10 = sld [smem:[#allocation0]]
  $region54: #{tpu_custom_call.1} parent=0
    _
  %s12 = ssub.s32 1, %s10
  %s13 = scalar_select 0, %s12, %s10
  $region1: #{tpu_custom_call.1} parent=0
    #allocation2 [shape = 'u8[65536]{0}', space=vmem, size = 0x10000, scoped, tag = 'input window, operand 2, single buffered']
    #allocation3 [shape = 's32[1]{0}', space=sflag, size = 0x4, scoped, tag = 'scoped memory for tpu_custom_call.1']
    #allocation4 [shape = 's32[1]{0}', space=sflag, size = 0x4, scoped, tag = 'scoped memory for tpu_custom_call.1']
    #allocation5 [shape = 'u8[65536]{0}', space=vmem, size = 0x10000, scoped, tag = 'input window, operand 4, single buffered']
    #allocation6 [shape = 's32[1]{0}', space=sflag, size = 0x4, scoped, tag = 'scoped memory for tpu_custom_call.1']
    #allocation7 [shape = 'u8[4096]{0}', space=vmem, size = 0x1000, scoped, tag = 'output window, operand 0, single buffered']
    #allocation8 [shape = 'u8[4096]{0}', space=vmem, size = 0x1000, scoped, tag = 'output window, operand 1, single buffered']
    #allocation9 [shape = 's32[1]{0}', space=sflag, size = 0x4, scoped, tag = 'scoped memory for tpu_custom_call.1']
    %14 = vsyncpa [#allocation3], 0
    %15 = vsyncpa [#allocation6], 0
    %16 = vsyncpa [#allocation4], 0
    %17 = vsyncpa [#allocation9], 0
    // Predicated region
    $region2: #{tpu_custom_call.1} parent=1 // pred_check
      _
    $region3: #{tpu_custom_call.1} parent=1 // pred_check_branch
      %19 = sbr.rel (0) target = $region5
    $region4: #{tpu_custom_call.1} parent=1 // pred_region
      _
    $region5: #{tpu_custom_call.1} parent=1 // pred_fallthru
      _
    // Predicated region
    $region6: #{tpu_custom_call.1} parent=1 // pred_check
      _
    $region7: #{tpu_custom_call.1} parent=1 // pred_check_branch
      %21 = sbr.rel (0) target = $region9
    $region8: #{tpu_custom_call.1} parent=1 // pred_region
      _
    $region9: #{tpu_custom_call.1} parent=1 // pred_fallthru
      _
    // Predicated region
    $region10: #{tpu_custom_call.1} parent=1 // pred_check
      _
    $region11: #{tpu_custom_call.1} parent=1 // pred_check_branch
      %23 = sbr.rel (0) target = $region13
    $region12: #{tpu_custom_call.1} parent=1 // pred_region
      %25 = vsyncadd [#allocation3], 0
      %s26 = sshll.u32 %s2, 4
      %s27 = int_to_ptr.hbm [resolvable:$true] %s26
      %s28 = sshll.u32 [#allocation2], 4
      %s29 = int_to_ptr.vmem [resolvable:$true] %s28
      %34 = dma.hbm_to_vmem [thread:$0]  %s27, 2048, %s29, [#allocation3], 128, 128, 8
    $region13: #{tpu_custom_call.1} parent=1 // pred_fallthru
      _
    // Predicated region
    $region14: #{tpu_custom_call.1} parent=1 // pred_check
      _
    $region15: #{tpu_custom_call.1} parent=1 // pred_check_branch
      %36 = sbr.rel (0) target = $region17
    $region16: #{tpu_custom_call.1} parent=1 // pred_region
      _
    $region17: #{tpu_custom_call.1} parent=1 // pred_fallthru
      _
    // Predicated region
    $region18: #{tpu_custom_call.1} parent=1 // pred_check
      _
    $region19: #{tpu_custom_call.1} parent=1 // pred_check_branch
      %38 = sbr.rel (0) target = $region21
    $region20: #{tpu_custom_call.1} parent=1 // pred_region
      %40 = vsyncadd [#allocation6], 0
      %s41 = sshll.u32 %s4, 4
      %s42 = int_to_ptr.hbm [resolvable:$true] %s41
      %s43 = sshll.u32 [#allocation5], 4
      %s44 = int_to_ptr.vmem [resolvable:$true] %s43
      %49 = dma.hbm_to_vmem [thread:$0]  %s42, 2048, %s44, [#allocation6], 128, 128, 8
    $region21: #{tpu_custom_call.1} parent=1 // pred_fallthru
      _
    // Predicated region
    $region22: #{tpu_custom_call.1} parent=1 // pred_check
      _
    $region23: #{tpu_custom_call.1} parent=1 // pred_check_branch
      %51 = sbr.rel (0) target = $region25
    $region24: #{tpu_custom_call.1} parent=1 // pred_region
      _
    $region25: #{tpu_custom_call.1} parent=1 // pred_fallthru
      _
    // Predicated region
    $region26: #{tpu_custom_call.1} parent=1 // pred_check
      _
    $region27: #{tpu_custom_call.1} parent=1 // pred_check_branch
      %53 = sbr.rel (0) target = $region29
    $region28: #{tpu_custom_call.1} parent=1 // pred_region
      _
    $region29: #{tpu_custom_call.1} parent=1 // pred_fallthru
      _
    // Predicated region
    $region30: #{tpu_custom_call.1} parent=1 // pred_check
      _
    $region31: #{tpu_custom_call.1} parent=1 // pred_check_branch
      %55 = sbr.rel (0) target = $region33
    $region32: #{tpu_custom_call.1} parent=1 // pred_region
      %57 = dma.done [#allocation3], 2048
    $region33: #{tpu_custom_call.1} parent=1 // pred_fallthru
      _
    // Predicated region
    $region34: #{tpu_custom_call.1} parent=1 // pred_check
      _
    $region35: #{tpu_custom_call.1} parent=1 // pred_check_branch
      %59 = sbr.rel (0) target = $region37
    $region36: #{tpu_custom_call.1} parent=1 // pred_region
      %61 = dma.done [#allocation6], 2048
    $region37: #{tpu_custom_call.1} parent=1 // pred_fallthru
      _
    %v62 = vld [vmem:[%s0] sm:$0xff]
    %v63 = vld [vmem:[#allocation2] sm:$0xff]
    %v64 = vld [vmem:[#allocation2 + $0x8] sm:$0xff]
    %v65 = vld [vmem:[#allocation2 + $0x10] sm:$0xff]
    %v66 = vld [vmem:[#allocation2 + $0x18] sm:$0xff]
    %v67 = vld [vmem:[#allocation2 + $0x20] sm:$0xff]
    %v68 = vld [vmem:[#allocation2 + $0x28] sm:$0xff]
    %v69 = vld [vmem:[#allocation2 + $0x30] sm:$0xff]
    %v70 = vld [vmem:[#allocation2 + $0x38] sm:$0xff]
    %v71 = vld [vmem:[#allocation2 + $0x40] sm:$0xff]
    %v72 = vld [vmem:[#allocation2 + $0x48] sm:$0xff]
    %v73 = vld [vmem:[#allocation2 + $0x50] sm:$0xff]
    %v74 = vld [vmem:[#allocation2 + $0x58] sm:$0xff]
    %v75 = vld [vmem:[#allocation2 + $0x60] sm:$0xff]
    %v76 = vld [vmem:[#allocation2 + $0x68] sm:$0xff]
    %v77 = vld [vmem:[#allocation2 + $0x70] sm:$0xff]
    %v78 = vld [vmem:[#allocation2 + $0x78] sm:$0xff]
    %v79 = vld [vmem:[%s3] sm:$0x1]
    %v80 = vld [vmem:[#allocation5] sm:$0xff]
    %v81 = vld [vmem:[#allocation5 + $0x8] sm:$0xff]
    %v82 = vld [vmem:[#allocation5 + $0x10] sm:$0xff]
    %v83 = vld [vmem:[#allocation5 + $0x18] sm:$0xff]
    %v84 = vld [vmem:[#allocation5 + $0x20] sm:$0xff]
    %v85 = vld [vmem:[#allocation5 + $0x28] sm:$0xff]
    %v86 = vld [vmem:[#allocation5 + $0x30] sm:$0xff]
    %v87 = vld [vmem:[#allocation5 + $0x38] sm:$0xff]
    %v88 = vld [vmem:[#allocation5 + $0x40] sm:$0xff]
    %v89 = vld [vmem:[#allocation5 + $0x48] sm:$0xff]
    %v90 = vld [vmem:[#allocation5 + $0x50] sm:$0xff]
    %v91 = vld [vmem:[#allocation5 + $0x58] sm:$0xff]
    %v92 = vld [vmem:[#allocation5 + $0x60] sm:$0xff]
    %v93 = vld [vmem:[#allocation5 + $0x68] sm:$0xff]
    %v94 = vld [vmem:[#allocation5 + $0x70] sm:$0xff]
    %v95 = vld [vmem:[#allocation5 + $0x78] sm:$0xff]
    %v96 = vld [vmem:[%s5] sm:$0x1]
    %v98 = vperm.slane %v79, 0
    %100 = vmatpush.msra.mxu0 %v78
    %101 = vmatpush.msra.mxu0 %v77
    %102 = vmatpush.msra.mxu0 %v76
    %103 = vmatpush.msra.mxu0 %v75
    %104 = vmatpush.msra.mxu0 %v74
    %105 = vmatpush.msra.mxu0 %v73
    %106 = vmatpush.msra.mxu0 %v72
    %107 = vmatpush.msra.mxu0 %v71
    %108 = vmatpush.msra.mxu0 %v70
    %109 = vmatpush.msra.mxu0 %v69
    %110 = vmatpush.msra.mxu0 %v68
    %111 = vmatpush.msra.mxu0 %v67
    %112 = vmatpush.msra.mxu0 %v66
    %113 = vmatpush.msra.mxu0 %v65
    %114 = vmatpush.msra.mxu0 %v64
    %115 = vmatpush.msra.mxu0 %v63
    %116 = vmatmul.f32.gmra.mxu0 %v62
    %v117 = vpop.f32.mrf.mxu0
    %v118 = vadd.f32 %v98, %v117
    %119 = vdwg.mxu0
    %v120 = vmax.f32 %v118, 0.0
    %v122 = vperm.slane %v96, 0
    %124 = vmatpush.msra.mxu0 %v95
    %125 = vmatpush.msra.mxu0 %v94
    %126 = vmatpush.msra.mxu0 %v93
    %127 = vmatpush.msra.mxu0 %v92
    %128 = vmatpush.msra.mxu0 %v91
    %129 = vmatpush.msra.mxu0 %v90
    %130 = vmatpush.msra.mxu0 %v89
    %131 = vmatpush.msra.mxu0 %v88
    %132 = vmatpush.msra.mxu0 %v87
    %133 = vmatpush.msra.mxu0 %v86
    %134 = vmatpush.msra.mxu0 %v85
    %135 = vmatpush.msra.mxu0 %v84
    %136 = vmatpush.msra.mxu0 %v83
    %137 = vmatpush.msra.mxu0 %v82
    %138 = vmatpush.msra.mxu0 %v81
    %139 = vmatpush.msra.mxu0 %v80
    %140 = vmatmul.f32.gmra.mxu0 %v120
    %v141 = vpop.f32.mrf.mxu0
    %v142 = vadd.f32 %v122, %v141
    %143 = vdwg.mxu0
    %144 = vst [vmem:[#allocation7] sm:$0xff] %v142
    %v145 = vlaneseq
    %v146 = vand.u32 %v145, 127
    %vm147 = vcmp.lt.s32.totalorder %v146, 4
    %v148 = vsel %vm147, %v142, -1e+30
    %149 = vmax.xlane.f32.xlu0 %v148
    %v150 = vpop.xlane.xlu0 %149
    %v151 = vsub.f32 %v148, %v150
    %v152 = vmul.f32 %v151, 1.442695
    %v153 = vpow.pop %v152
    %154 = vadd.xlane.f32.xlu0 %v153
    %v155 = vpop.xlane.xlu0 %154
    %v156 = vlog2.pop %v155
    %v157 = vmul.f32 %v156, 0.6931472
    %v158 = vadd.f32 %v150, %v157
    %v159 = vsub.f32 %v148, %v158
    %v160 = vld [vmem:[%s1] sm:$0xff]
    %161 = vset.pattern.permute.xlu0 0
    %162 = vperm.xlu0 %161, %v160
    %v163 = vpop.permute.xlu0 %162
    %vm164 = vcmp.eq.s32.totalorder %v146, %v163
    %v165 = vld [vmem:[%s6] sm:$0x1]
    %v167 = vperm.slane %v165, 0
    %v169 = vsel %vm164, %v167, 0.0
    %170 = vadd.xlane.f32.xlu0 %v169
    %v171 = vpop.xlane.xlu0 %170
    %v172 = vsel %vm164, %v159, 0.0
    %173 = vadd.xlane.f32.xlu0 %v172
    %v174 = vpop.xlane.xlu0 %173
    %v175 = vsub.f32 0.0, %v174
    %v176 = vmul.f32 %v171, %v175
    %vm177 = vcmask 7168
    %v178 = vsel %vm177, %v176, 0.0
    %179 = vadd.xlane.f32.xlu0 %v178
    %v180 = vpop.xlane.xlu0 %179
    %v181 = vrot.slane %v180, 4
    %v182 = vadd.f32 %v180, %v181
    %v183 = vrot.slane %v182, 2
    %v184 = vadd.f32 %v182, %v183
    %v185 = vrot.slane %v184, 1
    %v186 = vadd.f32 %v184, %v185
    %s187 = vtos %v186
    %v188 = vsel %vm177, %v171, 0.0
    %189 = vadd.xlane.f32.xlu0 %v188
    %v190 = vpop.xlane.xlu0 %189
    %v191 = vrot.slane %v190, 4
    %v192 = vadd.f32 %v190, %v191
    %v193 = vrot.slane %v192, 2
    %v194 = vadd.f32 %v192, %v193
    %v195 = vrot.slane %v194, 1
    %v196 = vadd.f32 %v194, %v195
    %s197 = vtos %v196
    %v198 = vlaneseq
    %v199 = vshrl.u32 %v198, 7
    %vm200 = vcmp.eq.s32.totalorder %v199, 0
    %vm201 = vcmp.eq.s32.totalorder %v146, 0
    %vm202 = vmand %vm200, %vm201
    %vm203 = vcmp.eq.s32.totalorder %v146, 1
    %vm204 = vmand %vm200, %vm203
    %v205 = vstv %s197
    %v206 = vsel %vm204, %v205, 0.0
    %v207 = vstv %s187
    %v208 = vsel %vm202, %v207, %v206
    %209 = vst [vmem:[#allocation8] sm:$0xff] %v208
    // Predicated region
    $region38: #{tpu_custom_call.1} parent=1 // pred_check
      _
    $region39: #{tpu_custom_call.1} parent=1 // pred_check_branch
      %211 = sbr.rel (0) target = $region41
    $region40: #{tpu_custom_call.1} parent=1 // pred_region
      %213 = vsyncadd [#allocation4], 0
      %s215 = sshll.u32 [#allocation7], 4
      %s216 = int_to_ptr.vmem [resolvable:$true] %s215
      %s217 = sshll.u32 %s7, 4
      %s218 = int_to_ptr.hbm [resolvable:$true] %s217
      %220 = dma.vmem_to_hbm [thread:$0]  %s216, 128, %s218, [#allocation4]
    $region41: #{tpu_custom_call.1} parent=1 // pred_fallthru
      _
    // Predicated region
    $region42: #{tpu_custom_call.1} parent=1 // pred_check
      _
    $region43: #{tpu_custom_call.1} parent=1 // pred_check_branch
      %222 = sbr.rel (0) target = $region45
    $region44: #{tpu_custom_call.1} parent=1 // pred_region
      %224 = vsyncadd [#allocation9], 0
      %s226 = sshll.u32 [#allocation8], 4
      %s227 = int_to_ptr.vmem [resolvable:$true] %s226
      %s228 = sshll.u32 %s8, 4
      %s229 = int_to_ptr.hbm [resolvable:$true] %s228
      %231 = dma.vmem_to_hbm [thread:$0]  %s227, 128, %s229, [#allocation9]
    $region45: #{tpu_custom_call.1} parent=1 // pred_fallthru
      _
    // Predicated region
    $region46: #{tpu_custom_call.1} parent=1 // pred_check
      _
    $region47: #{tpu_custom_call.1} parent=1 // pred_check_branch
      %233 = sbr.rel (0) target = $region49
    $region48: #{tpu_custom_call.1} parent=1 // pred_region
      %235 = dma.done [#allocation4], 128
    $region49: #{tpu_custom_call.1} parent=1 // pred_fallthru
      _
    // Predicated region
    $region50: #{tpu_custom_call.1} parent=1 // pred_check
      _
    $region51: #{tpu_custom_call.1} parent=1 // pred_check_branch
      %237 = sbr.rel (0) target = $region53
    $region52: #{tpu_custom_call.1} parent=1 // pred_region
      %239 = dma.done [#allocation9], 128
    $region53: #{tpu_custom_call.1} parent=1 // pred_fallthru
      _
    %240 = vsyncpa [#allocation3], 1
    %241 = vsyncpa [#allocation6], 1
    %242 = vsyncpa [#allocation4], 1
    %243 = vsyncpa [#allocation9], 1

</llo_original>
